<compile_context>
chip_gen: v7x
topology: tpu7x:2x2x1
jax: 0.10.0
libtpu: 0.0.40
codegen_flags: <defaults>
</compile_context>

<pallas_src>
import jax
import jax.numpy as jnp
from jax.experimental import pallas as pl
from jax.experimental.pallas import tpu as pltpu

LN_EPS = 1e-5  # torch.nn.LayerNorm default


def _round_up(n, m):
    return ((n + m - 1) // m) * m


# ---------------------------------------------------------------------------
# Fused kernel
# ---------------------------------------------------------------------------
def _ln_relu(y, g, beta):
    """relu(LayerNorm(y) * g + beta), biased variance (torch semantics).

    Two-pass mean/variance to match the reference bit-for-bit at f32;
    these VPU/EUP ops are filler relative to the MXU matmuls anyway.
    """
    mean = jnp.mean(y, axis=-1, keepdims=True)
    var = jnp.mean(jnp.square(y - mean), axis=-1, keepdims=True)
    norm = (y - mean) * jax.lax.rsqrt(var + LN_EPS)
    return jnp.maximum(norm * g + beta, 0.0)


def _make_fcq_kernel(n_states, n_shared):
    """Build the fused kernel body for a given layer structure.

    Ref order (matching the wrapper's flattening):
      states_block, actions_block,
      per states-layer:  W, b, gamma, beta
      shared layer 0:    Wx, Wa, b, gamma, beta     (weight pre-split)
      shared layer i>0:  W, b, gamma, beta
      head (n_shared>0): w_row [1,K], b [1,1]
      head (n_shared==0): wx_row [1,dx], wa_row [1,da], b [1,1]
      out_ref (last)
    """

    def kernel(*refs):
        out_ref = refs[-1]
        s_ref, a_ref = refs[0], refs[1]
        idx = 2

        # --- states branch -------------------------------------------------
        x = s_ref[...]
        for _ in range(n_states):
            w, b, g, bt = refs[idx:idx + 4]
            idx += 4
            y = jnp.dot(x, w[...], preferred_element_type=jnp.float32) + b[...]
            x = _ln_relu(y, g[...], bt[...])

        # --- shared trunk (concat folded into split weights) ---------------
        a = a_ref[...]
        for li in range(n_shared):
            if li == 0:
                wx, wa, b, g, bt = refs[idx:idx + 5]
                idx += 5
                y = (jnp.dot(x, wx[...], preferred_element_type=jnp.float32)
                     + jnp.dot(a, wa[...], preferred_element_type=jnp.float32)
                     + b[...])
            else:
                w, b, g, bt = refs[idx:idx + 4]
                idx += 4
                y = jnp.dot(x, w[...], preferred_element_type=jnp.float32) + b[...]
            x = _ln_relu(y, g[...], bt[...])

        # --- Q head: VPU multiply + row-sum (avoids an N=1 MXU matmul) -----
        if n_shared == 0:
            wrx, wra, b_out = refs[idx], refs[idx + 1], refs[idx + 2]
            q = (jnp.sum(x * wrx[...], axis=-1, keepdims=True)
                 + jnp.sum(a * wra[...], axis=-1, keepdims=True)
                 + b_out[...])
        else:
            w_row, b_out = refs[idx], refs[idx + 1]
            q = jnp.sum(x * w_row[...], axis=-1, keepdims=True) + b_out[...]

        out_ref[...] = q.astype(out_ref.dtype)

    return kernel


# ---------------------------------------------------------------------------
# Wrapper: single fused pallas_call, batch-tiled grid
# ---------------------------------------------------------------------------
def fcq_forward(params, states, actions, *, block_rows=1024):
    states = states.astype(jnp.float32)
    actions = actions.astype(jnp.float32)
    B, d_s = states.shape
    d_a = actions.shape[1]

    n_states = len(params["states"])
    n_shared = len(params["shared"])
    d_x = params["states"][-1][0].shape[1] if n_states else d_s

    # Batch tiling: rows must be a multiple of 8 (f32 sublane); pad batch.
    tb = min(block_rows, _round_up(B, 8))
    padded_b = _round_up(B, tb)
    if padded_b != B:
        pad = padded_b - B
        states = jnp.pad(states, ((0, pad), (0, 0)))
        actions = jnp.pad(actions, ((0, pad), (0, 0)))

    flat = [states, actions]
    in_specs = [
        pl.BlockSpec((tb, d_s), lambda i: (i, 0)),
        pl.BlockSpec((tb, d_a), lambda i: (i, 0)),
    ]

    def add_const(arr):
        """Full-array block, same block every grid step -> VMEM-resident."""
        flat.append(arr)
        in_specs.append(pl.BlockSpec(arr.shape, lambda i: (0, 0)))

    for (w, b, g, bt) in params["states"]:
        add_const(w)
        add_const(b.reshape(1, -1))
        add_const(g.reshape(1, -1))
        add_const(bt.reshape(1, -1))

    for li, (w, b, g, bt) in enumerate(params["shared"]):
        if li == 0:
            add_const(w[:d_x, :])   # rows multiplying the states branch
            add_const(w[d_x:, :])   # rows multiplying the actions
        else:
            add_const(w)
        add_const(b.reshape(1, -1))
        add_const(g.reshape(1, -1))
        add_const(bt.reshape(1, -1))

    w_o, b_o = params["out"]
    if n_shared == 0:
        add_const(w_o[:d_x, :].reshape(1, -1))
        add_const(w_o[d_x:, :].reshape(1, -1))
    else:
        add_const(w_o.reshape(1, -1))
    add_const(b_o.reshape(1, 1))

    kernel = _make_fcq_kernel(n_states, n_shared)

    out = pl.pallas_call(
        kernel,
        out_shape=jax.ShapeDtypeStruct((padded_b, 1), jnp.float32),
        grid=(padded_b // tb,),
        in_specs=in_specs,
        out_specs=pl.BlockSpec((tb, 1), lambda i: (i, 0)),
        compiler_params=pltpu.CompilerParams(
            dimension_semantics=("parallel",),      # v7x: both TensorCores
            vmem_limit_bytes=32 * 1024 * 1024,      # safe on v5e/v6e/v7x
        ),
    )(*flat)

    return out[:B]


# ---------------------------------------------------------------------------
# Parameter init (deterministic, PyTorch-like shapes; synthetic values)
# ---------------------------------------------------------------------------
def _init_linear(key, d_in, d_out):
    kw, kb = jax.random.split(key)
    bound = 1.0 / jnp.sqrt(jnp.float32(d_in))
    w = jax.random.uniform(kw, (d_in, d_out), jnp.float32, -bound, bound)
    b = jax.random.uniform(kb, (d_out,), jnp.float32, -bound, bound)
    return w, b


def init_fcq_params(key, states_input_size, actions_input_size,
                    states_hidden_layers, shared_hidden_layers):
    params = {"states": [], "shared": []}
    prev = states_input_size
    for size in states_hidden_layers:
        key, sub = jax.random.split(key)
        w, b = _init_linear(sub, prev, size)
        params["states"].append(
            (w, b, jnp.ones((size,), jnp.float32), jnp.zeros((size,), jnp.float32)))
        prev = size
    prev = prev + actions_input_size
    for size in shared_hidden_layers:
        key, sub = jax.random.split(key)
        w, b = _init_linear(sub, prev, size)
        params["shared"].append(
            (w, b, jnp.ones((size,), jnp.float32), jnp.zeros((size,), jnp.float32)))
        prev = size
    key, sub = jax.random.split(key)
    params["out"] = _init_linear(sub, prev, 1)
    return params


# ---------------------------------------------------------------------------
# Pure-JAX reference for correctness checking.
# ---------------------------------------------------------------------------
def fcq_forward_ref(params, states, actions):
    def ln(y, g, be):
        m = jnp.mean(y, axis=-1, keepdims=True)
        v = jnp.mean((y - m) ** 2, axis=-1, keepdims=True)
        return (y - m) / jnp.sqrt(v + LN_EPS) * g + be

    x = states.astype(jnp.float32)
    a = actions.astype(jnp.float32)
    for (w, b, g, be) in params["states"]:
        x = jax.nn.relu(ln(x @ w + b, g, be))
    x = jnp.concatenate((x, a), axis=1)
    for (w, b, g, be) in params["shared"]:
        x = jax.nn.relu(ln(x @ w + b, g, be))
    w_o, b_o = params["out"]
    return x @ w_o + b_o


# ---------------------------------------------------------------------------
if __name__ == "__main__":
    key = jax.random.PRNGKey(0)

    batch = 8
    states_input_size = 16
    actions_input_size = 4
    states_hidden_layers = (32, 32)
    shared_hidden_layers = (64, 32)

    k_params, k_s, k_a = jax.random.split(key, 3)
    params = init_fcq_params(k_params, states_input_size, actions_input_size,
                             states_hidden_layers, shared_hidden_layers)

    states = jax.random.normal(k_s, (batch, states_input_size), jnp.float32)
    actions = jax.random.normal(k_a, (batch, actions_input_size), jnp.float32)

    # jit the wrapper so the host-side pad / weight-split / reshape ops fuse
    # with the pallas_call into one dispatched computation.
    fcq_fwd = jax.jit(fcq_forward)

    q = fcq_fwd(params, states, actions)
    q = jax.block_until_ready(q)

    q_ref = fcq_forward_ref(params, states, actions)
    assert q.shape == (batch, 1)
    assert jnp.allclose(q, q_ref, atol=1e-4, rtol=1e-4)

    print("KERNEL_OK")
</pallas_src>

<mosaic_0001>
module attributes {stable_mosaic.version = 11 : i64} {
  func.func @kernel(%arg0: i32, %arg1: memref<8x16xf32, #tpu.memory_space<vmem>>, %arg2: memref<8x4xf32, #tpu.memory_space<vmem>>, %arg3: memref<16x32xf32, #tpu.memory_space<vmem>>, %arg4: memref<1x32xf32, #tpu.memory_space<vmem>>, %arg5: memref<1x32xf32, #tpu.memory_space<vmem>>, %arg6: memref<1x32xf32, #tpu.memory_space<vmem>>, %arg7: memref<32x32xf32, #tpu.memory_space<vmem>>, %arg8: memref<1x32xf32, #tpu.memory_space<vmem>>, %arg9: memref<1x32xf32, #tpu.memory_space<vmem>>, %arg10: memref<1x32xf32, #tpu.memory_space<vmem>>, %arg11: memref<32x64xf32, #tpu.memory_space<vmem>>, %arg12: memref<4x64xf32, #tpu.memory_space<vmem>>, %arg13: memref<1x64xf32, #tpu.memory_space<vmem>>, %arg14: memref<1x64xf32, #tpu.memory_space<vmem>>, %arg15: memref<1x64xf32, #tpu.memory_space<vmem>>, %arg16: memref<64x32xf32, #tpu.memory_space<vmem>>, %arg17: memref<1x32xf32, #tpu.memory_space<vmem>>, %arg18: memref<1x32xf32, #tpu.memory_space<vmem>>, %arg19: memref<1x32xf32, #tpu.memory_space<vmem>>, %arg20: memref<1x32xf32, #tpu.memory_space<vmem>>, %arg21: memref<1x1xf32, #tpu.memory_space<vmem>>, %arg22: memref<8x1xf32, #tpu.memory_space<vmem>>) attributes {dimension_semantics = [#tpu.dimension_semantics<parallel>], iteration_bounds = array<i64: 1>, scalar_prefetch = 0 : i64, scratch_operands = 0 : i64, tpu.core_type = #tpu.core_type<tc>, window_params = [{transform_indices = @transform_0, window_bounds = array<i64: 8, 16>}, {transform_indices = @transform_1, window_bounds = array<i64: 8, 4>}, {pipeline_mode = #tpu.pipeline_mode<synchronous>, transform_indices = @transform_2, window_bounds = array<i64: 16, 32>}, {pipeline_mode = #tpu.pipeline_mode<synchronous>, transform_indices = @transform_3, window_bounds = array<i64: 1, 32>}, {pipeline_mode = #tpu.pipeline_mode<synchronous>, transform_indices = @transform_4, window_bounds = array<i64: 1, 32>}, {pipeline_mode = #tpu.pipeline_mode<synchronous>, transform_indices = @transform_5, window_bounds = array<i64: 1, 32>}, {pipeline_mode = #tpu.pipeline_mode<synchronous>, transform_indices = @transform_6, window_bounds = array<i64: 32, 32>}, {pipeline_mode = #tpu.pipeline_mode<synchronous>, transform_indices = @transform_7, window_bounds = array<i64: 1, 32>}, {pipeline_mode = #tpu.pipeline_mode<synchronous>, transform_indices = @transform_8, window_bounds = array<i64: 1, 32>}, {pipeline_mode = #tpu.pipeline_mode<synchronous>, transform_indices = @transform_9, window_bounds = array<i64: 1, 32>}, {pipeline_mode = #tpu.pipeline_mode<synchronous>, transform_indices = @transform_10, window_bounds = array<i64: 32, 64>}, {pipeline_mode = #tpu.pipeline_mode<synchronous>, transform_indices = @transform_11, window_bounds = array<i64: 4, 64>}, {pipeline_mode = #tpu.pipeline_mode<synchronous>, transform_indices = @transform_12, window_bounds = array<i64: 1, 64>}, {pipeline_mode = #tpu.pipeline_mode<synchronous>, transform_indices = @transform_13, window_bounds = array<i64: 1, 64>}, {pipeline_mode = #tpu.pipeline_mode<synchronous>, transform_indices = @transform_14, window_bounds = array<i64: 1, 64>}, {pipeline_mode = #tpu.pipeline_mode<synchronous>, transform_indices = @transform_15, window_bounds = array<i64: 64, 32>}, {pipeline_mode = #tpu.pipeline_mode<synchronous>, transform_indices = @transform_16, window_bounds = array<i64: 1, 32>}, {pipeline_mode = #tpu.pipeline_mode<synchronous>, transform_indices = @transform_17, window_bounds = array<i64: 1, 32>}, {pipeline_mode = #tpu.pipeline_mode<synchronous>, transform_indices = @transform_18, window_bounds = array<i64: 1, 32>}, {pipeline_mode = #tpu.pipeline_mode<synchronous>, transform_indices = @transform_19, window_bounds = array<i64: 1, 32>}, {pipeline_mode = #tpu.pipeline_mode<synchronous>, transform_indices = @transform_20, window_bounds = array<i64: 1, 1>}, {transform_indices = @transform_21, window_bounds = array<i64: 8, 1>}]} {
    %c0 = arith.constant 0 : index
    %c0_0 = arith.constant 0 : index
    %0 = vector.load %arg1[%c0, %c0_0] : memref<8x16xf32, #tpu.memory_space<vmem>>, vector<8x16xf32>
    %c0_1 = arith.constant 0 : index
    %c0_2 = arith.constant 0 : index
    %1 = vector.load %arg3[%c0_1, %c0_2] : memref<16x32xf32, #tpu.memory_space<vmem>>, vector<16x32xf32>
    %cst = arith.constant dense<0.000000e+00> : vector<8x32xf32>
    %2 = tpu.matmul %0, %1, %cst {dimension_numbers = #tpu.dot_dimension_numbers<[1], [0], [0], [1], [0, 0, 1, 1], [], []>} : vector<8x16xf32>, vector<16x32xf32>, vector<8x32xf32> -> vector<8x32xf32>
    %c0_3 = arith.constant 0 : index
    %c0_4 = arith.constant 0 : index
    %3 = vector.load %arg4[%c0_3, %c0_4] : memref<1x32xf32, #tpu.memory_space<vmem>>, vector<1x32xf32>
    %4 = vector.broadcast %3 : vector<1x32xf32> to vector<8x32xf32>
    %5 = arith.addf %2, %4 : vector<8x32xf32>
    %c0_5 = arith.constant 0 : index
    %c0_6 = arith.constant 0 : index
    %6 = vector.load %arg5[%c0_5, %c0_6] : memref<1x32xf32, #tpu.memory_space<vmem>>, vector<1x32xf32>
    %c0_7 = arith.constant 0 : index
    %c0_8 = arith.constant 0 : index
    %7 = vector.load %arg6[%c0_7, %c0_8] : memref<1x32xf32, #tpu.memory_space<vmem>>, vector<1x32xf32>
    %cst_9 = arith.constant dense<0.000000e+00> : vector<8xf32>
    %8 = vector.multi_reduction <add>, %5, %cst_9 [1] : vector<8x32xf32> to vector<8xf32>
    %9 = vector.shape_cast %8 : vector<8xf32> to vector<8x1xf32>
    %cst_10 = arith.constant 3.200000e+01 : f32
    %10 = vector.broadcast %cst_10 : f32 to vector<8x1xf32>
    %11 = arith.divf %9, %10 : vector<8x1xf32>
    %12 = vector.broadcast %11 : vector<8x1xf32> to vector<8x32xf32>
    %13 = arith.subf %5, %12 : vector<8x32xf32>
    %14 = arith.mulf %13, %13 : vector<8x32xf32>
    %cst_11 = arith.constant dense<0.000000e+00> : vector<8xf32>
    %15 = vector.multi_reduction <add>, %14, %cst_11 [1] : vector<8x32xf32> to vector<8xf32>
    %16 = vector.shape_cast %15 : vector<8xf32> to vector<8x1xf32>
    %cst_12 = arith.constant 3.200000e+01 : f32
    %17 = vector.broadcast %cst_12 : f32 to vector<8x1xf32>
    %18 = arith.divf %16, %17 : vector<8x1xf32>
    %19 = vector.broadcast %11 : vector<8x1xf32> to vector<8x32xf32>
    %20 = arith.subf %5, %19 : vector<8x32xf32>
    %cst_13 = arith.constant 9.99999974E-6 : f32
    %21 = vector.broadcast %cst_13 : f32 to vector<8x1xf32>
    %22 = arith.addf %18, %21 : vector<8x1xf32>
    %23 = math.rsqrt %22 : vector<8x1xf32>
    %24 = vector.broadcast %23 : vector<8x1xf32> to vector<8x32xf32>
    %25 = arith.mulf %20, %24 : vector<8x32xf32>
    %26 = vector.broadcast %6 : vector<1x32xf32> to vector<8x32xf32>
    %27 = arith.mulf %25, %26 : vector<8x32xf32>
    %28 = vector.broadcast %7 : vector<1x32xf32> to vector<8x32xf32>
    %29 = arith.addf %27, %28 : vector<8x32xf32>
    %cst_14 = arith.constant 0.000000e+00 : f32
    %30 = vector.broadcast %cst_14 : f32 to vector<8x32xf32>
    %31 = arith.maximumf %29, %30 : vector<8x32xf32>
    %c0_15 = arith.constant 0 : index
    %c0_16 = arith.constant 0 : index
    %32 = vector.load %arg7[%c0_15, %c0_16] : memref<32x32xf32, #tpu.memory_space<vmem>>, vector<32x32xf32>
    %cst_17 = arith.constant dense<0.000000e+00> : vector<8x32xf32>
    %33 = tpu.matmul %31, %32, %cst_17 {dimension_numbers = #tpu.dot_dimension_numbers<[1], [0], [0], [1], [0, 0, 1, 1], [], []>} : vector<8x32xf32>, vector<32x32xf32>, vector<8x32xf32> -> vector<8x32xf32>
    %c0_18 = arith.constant 0 : index
    %c0_19 = arith.constant 0 : index
    %34 = vector.load %arg8[%c0_18, %c0_19] : memref<1x32xf32, #tpu.memory_space<vmem>>, vector<1x32xf32>
    %35 = vector.broadcast %34 : vector<1x32xf32> to vector<8x32xf32>
    %36 = arith.addf %33, %35 : vector<8x32xf32>
    %c0_20 = arith.constant 0 : index
    %c0_21 = arith.constant 0 : index
    %37 = vector.load %arg9[%c0_20, %c0_21] : memref<1x32xf32, #tpu.memory_space<vmem>>, vector<1x32xf32>
    %c0_22 = arith.constant 0 : index
    %c0_23 = arith.constant 0 : index
    %38 = vector.load %arg10[%c0_22, %c0_23] : memref<1x32xf32, #tpu.memory_space<vmem>>, vector<1x32xf32>
    %cst_24 = arith.constant dense<0.000000e+00> : vector<8xf32>
    %39 = vector.multi_reduction <add>, %36, %cst_24 [1] : vector<8x32xf32> to vector<8xf32>
    %40 = vector.shape_cast %39 : vector<8xf32> to vector<8x1xf32>
    %cst_25 = arith.constant 3.200000e+01 : f32
    %41 = vector.broadcast %cst_25 : f32 to vector<8x1xf32>
    %42 = arith.divf %40, %41 : vector<8x1xf32>
    %43 = vector.broadcast %42 : vector<8x1xf32> to vector<8x32xf32>
    %44 = arith.subf %36, %43 : vector<8x32xf32>
    %45 = arith.mulf %44, %44 : vector<8x32xf32>
    %cst_26 = arith.constant dense<0.000000e+00> : vector<8xf32>
    %46 = vector.multi_reduction <add>, %45, %cst_26 [1] : vector<8x32xf32> to vector<8xf32>
    %47 = vector.shape_cast %46 : vector<8xf32> to vector<8x1xf32>
    %cst_27 = arith.constant 3.200000e+01 : f32
    %48 = vector.broadcast %cst_27 : f32 to vector<8x1xf32>
    %49 = arith.divf %47, %48 : vector<8x1xf32>
    %50 = vector.broadcast %42 : vector<8x1xf32> to vector<8x32xf32>
    %51 = arith.subf %36, %50 : vector<8x32xf32>
    %cst_28 = arith.constant 9.99999974E-6 : f32
    %52 = vector.broadcast %cst_28 : f32 to vector<8x1xf32>
    %53 = arith.addf %49, %52 : vector<8x1xf32>
    %54 = math.rsqrt %53 : vector<8x1xf32>
    %55 = vector.broadcast %54 : vector<8x1xf32> to vector<8x32xf32>
    %56 = arith.mulf %51, %55 : vector<8x32xf32>
    %57 = vector.broadcast %37 : vector<1x32xf32> to vector<8x32xf32>
    %58 = arith.mulf %56, %57 : vector<8x32xf32>
    %59 = vector.broadcast %38 : vector<1x32xf32> to vector<8x32xf32>
    %60 = arith.addf %58, %59 : vector<8x32xf32>
    %cst_29 = arith.constant 0.000000e+00 : f32
    %61 = vector.broadcast %cst_29 : f32 to vector<8x32xf32>
    %62 = arith.maximumf %60, %61 : vector<8x32xf32>
    %c0_30 = arith.constant 0 : index
    %c0_31 = arith.constant 0 : index
    %63 = vector.load %arg2[%c0_30, %c0_31] : memref<8x4xf32, #tpu.memory_space<vmem>>, vector<8x4xf32>
    %c0_32 = arith.constant 0 : index
    %c0_33 = arith.constant 0 : index
    %64 = vector.load %arg11[%c0_32, %c0_33] : memref<32x64xf32, #tpu.memory_space<vmem>>, vector<32x64xf32>
    %cst_34 = arith.constant dense<0.000000e+00> : vector<8x64xf32>
    %65 = tpu.matmul %62, %64, %cst_34 {dimension_numbers = #tpu.dot_dimension_numbers<[1], [0], [0], [1], [0, 0, 1, 1], [], []>} : vector<8x32xf32>, vector<32x64xf32>, vector<8x64xf32> -> vector<8x64xf32>
    %c0_35 = arith.constant 0 : index
    %c0_36 = arith.constant 0 : index
    %66 = vector.load %arg12[%c0_35, %c0_36] : memref<4x64xf32, #tpu.memory_space<vmem>>, vector<4x64xf32>
    %cst_37 = arith.constant dense<0.000000e+00> : vector<8x64xf32>
    %67 = tpu.matmul %63, %66, %cst_37 {dimension_numbers = #tpu.dot_dimension_numbers<[1], [0], [0], [1], [0, 0, 1, 1], [], []>} : vector<8x4xf32>, vector<4x64xf32>, vector<8x64xf32> -> vector<8x64xf32>
    %68 = arith.addf %65, %67 : vector<8x64xf32>
    %c0_38 = arith.constant 0 : index
    %c0_39 = arith.constant 0 : index
    %69 = vector.load %arg13[%c0_38, %c0_39] : memref<1x64xf32, #tpu.memory_space<vmem>>, vector<1x64xf32>
    %70 = vector.broadcast %69 : vector<1x64xf32> to vector<8x64xf32>
    %71 = arith.addf %68, %70 : vector<8x64xf32>
    %c0_40 = arith.constant 0 : index
    %c0_41 = arith.constant 0 : index
    %72 = vector.load %arg14[%c0_40, %c0_41] : memref<1x64xf32, #tpu.memory_space<vmem>>, vector<1x64xf32>
    %c0_42 = arith.constant 0 : index
    %c0_43 = arith.constant 0 : index
    %73 = vector.load %arg15[%c0_42, %c0_43] : memref<1x64xf32, #tpu.memory_space<vmem>>, vector<1x64xf32>
    %cst_44 = arith.constant dense<0.000000e+00> : vector<8xf32>
    %74 = vector.multi_reduction <add>, %71, %cst_44 [1] : vector<8x64xf32> to vector<8xf32>
    %75 = vector.shape_cast %74 : vector<8xf32> to vector<8x1xf32>
    %cst_45 = arith.constant 6.400000e+01 : f32
    %76 = vector.broadcast %cst_45 : f32 to vector<8x1xf32>
    %77 = arith.divf %75, %76 : vector<8x1xf32>
    %78 = vector.broadcast %77 : vector<8x1xf32> to vector<8x64xf32>
    %79 = arith.subf %71, %78 : vector<8x64xf32>
    %80 = arith.mulf %79, %79 : vector<8x64xf32>
    %cst_46 = arith.constant dense<0.000000e+00> : vector<8xf32>
    %81 = vector.multi_reduction <add>, %80, %cst_46 [1] : vector<8x64xf32> to vector<8xf32>
    %82 = vector.shape_cast %81 : vector<8xf32> to vector<8x1xf32>
    %cst_47 = arith.constant 6.400000e+01 : f32
    %83 = vector.broadcast %cst_47 : f32 to vector<8x1xf32>
    %84 = arith.divf %82, %83 : vector<8x1xf32>
    %85 = vector.broadcast %77 : vector<8x1xf32> to vector<8x64xf32>
    %86 = arith.subf %71, %85 : vector<8x64xf32>
    %cst_48 = arith.constant 9.99999974E-6 : f32
    %87 = vector.broadcast %cst_48 : f32 to vector<8x1xf32>
    %88 = arith.addf %84, %87 : vector<8x1xf32>
    %89 = math.rsqrt %88 : vector<8x1xf32>
    %90 = vector.broadcast %89 : vector<8x1xf32> to vector<8x64xf32>
    %91 = arith.mulf %86, %90 : vector<8x64xf32>
    %92 = vector.broadcast %72 : vector<1x64xf32> to vector<8x64xf32>
    %93 = arith.mulf %91, %92 : vector<8x64xf32>
    %94 = vector.broadcast %73 : vector<1x64xf32> to vector<8x64xf32>
    %95 = arith.addf %93, %94 : vector<8x64xf32>
    %cst_49 = arith.constant 0.000000e+00 : f32
    %96 = vector.broadcast %cst_49 : f32 to vector<8x64xf32>
    %97 = arith.maximumf %95, %96 : vector<8x64xf32>
    %c0_50 = arith.constant 0 : index
    %c0_51 = arith.constant 0 : index
    %98 = vector.load %arg16[%c0_50, %c0_51] : memref<64x32xf32, #tpu.memory_space<vmem>>, vector<64x32xf32>
    %cst_52 = arith.constant dense<0.000000e+00> : vector<8x32xf32>
    %99 = tpu.matmul %97, %98, %cst_52 {dimension_numbers = #tpu.dot_dimension_numbers<[1], [0], [0], [1], [0, 0, 1, 1], [], []>} : vector<8x64xf32>, vector<64x32xf32>, vector<8x32xf32> -> vector<8x32xf32>
    %c0_53 = arith.constant 0 : index
    %c0_54 = arith.constant 0 : index
    %100 = vector.load %arg17[%c0_53, %c0_54] : memref<1x32xf32, #tpu.memory_space<vmem>>, vector<1x32xf32>
    %101 = vector.broadcast %100 : vector<1x32xf32> to vector<8x32xf32>
    %102 = arith.addf %99, %101 : vector<8x32xf32>
    %c0_55 = arith.constant 0 : index
    %c0_56 = arith.constant 0 : index
    %103 = vector.load %arg18[%c0_55, %c0_56] : memref<1x32xf32, #tpu.memory_space<vmem>>, vector<1x32xf32>
    %c0_57 = arith.constant 0 : index
    %c0_58 = arith.constant 0 : index
    %104 = vector.load %arg19[%c0_57, %c0_58] : memref<1x32xf32, #tpu.memory_space<vmem>>, vector<1x32xf32>
    %cst_59 = arith.constant dense<0.000000e+00> : vector<8xf32>
    %105 = vector.multi_reduction <add>, %102, %cst_59 [1] : vector<8x32xf32> to vector<8xf32>
    %106 = vector.shape_cast %105 : vector<8xf32> to vector<8x1xf32>
    %cst_60 = arith.constant 3.200000e+01 : f32
    %107 = vector.broadcast %cst_60 : f32 to vector<8x1xf32>
    %108 = arith.divf %106, %107 : vector<8x1xf32>
    %109 = vector.broadcast %108 : vector<8x1xf32> to vector<8x32xf32>
    %110 = arith.subf %102, %109 : vector<8x32xf32>
    %111 = arith.mulf %110, %110 : vector<8x32xf32>
    %cst_61 = arith.constant dense<0.000000e+00> : vector<8xf32>
    %112 = vector.multi_reduction <add>, %111, %cst_61 [1] : vector<8x32xf32> to vector<8xf32>
    %113 = vector.shape_cast %112 : vector<8xf32> to vector<8x1xf32>
    %cst_62 = arith.constant 3.200000e+01 : f32
    %114 = vector.broadcast %cst_62 : f32 to vector<8x1xf32>
    %115 = arith.divf %113, %114 : vector<8x1xf32>
    %116 = vector.broadcast %108 : vector<8x1xf32> to vector<8x32xf32>
    %117 = arith.subf %102, %116 : vector<8x32xf32>
    %cst_63 = arith.constant 9.99999974E-6 : f32
    %118 = vector.broadcast %cst_63 : f32 to vector<8x1xf32>
    %119 = arith.addf %115, %118 : vector<8x1xf32>
    %120 = math.rsqrt %119 : vector<8x1xf32>
    %121 = vector.broadcast %120 : vector<8x1xf32> to vector<8x32xf32>
    %122 = arith.mulf %117, %121 : vector<8x32xf32>
    %123 = vector.broadcast %103 : vector<1x32xf32> to vector<8x32xf32>
    %124 = arith.mulf %122, %123 : vector<8x32xf32>
    %125 = vector.broadcast %104 : vector<1x32xf32> to vector<8x32xf32>
    %126 = arith.addf %124, %125 : vector<8x32xf32>
    %cst_64 = arith.constant 0.000000e+00 : f32
    %127 = vector.broadcast %cst_64 : f32 to vector<8x32xf32>
    %128 = arith.maximumf %126, %127 : vector<8x32xf32>
    %c0_65 = arith.constant 0 : index
    %c0_66 = arith.constant 0 : index
    %129 = vector.load %arg20[%c0_65, %c0_66] : memref<1x32xf32, #tpu.memory_space<vmem>>, vector<1x32xf32>
    %130 = vector.broadcast %129 : vector<1x32xf32> to vector<8x32xf32>
    %131 = arith.mulf %128, %130 : vector<8x32xf32>
    %cst_67 = arith.constant dense<0.000000e+00> : vector<8xf32>
    %132 = vector.multi_reduction <add>, %131, %cst_67 [1] : vector<8x32xf32> to vector<8xf32>
    %133 = vector.shape_cast %132 : vector<8xf32> to vector<8x1xf32>
    %c0_68 = arith.constant 0 : index
    %c0_69 = arith.constant 0 : index
    %134 = vector.load %arg21[%c0_68, %c0_69] : memref<1x1xf32, #tpu.memory_space<vmem>>, vector<1x1xf32>
    %135 = vector.broadcast %134 : vector<1x1xf32> to vector<8x1xf32>
    %136 = arith.addf %133, %135 : vector<8x1xf32>
    %c0_70 = arith.constant 0 : index
    %c0_71 = arith.constant 0 : index
    %137 = vector.load %arg22[%c0_70, %c0_71] : memref<8x1xf32, #tpu.memory_space<vmem>>, vector<8x1xf32>
    tpu.vector_store %arg22[%c0_70, %c0_71], %136 {strides = array<i32>} : memref<8x1xf32, #tpu.memory_space<vmem>>, vector<8x1xf32>,
    return
  }
  func.func @transform_0(%arg0: i32) -> (i32, i32) {
    %c0_i32 = arith.constant 0 : i32
    %c0_i32_0 = arith.constant 0 : i32
    return %arg0, %c0_i32 : i32, i32
  }
  func.func @transform_1(%arg0: i32) -> (i32, i32) {
    %c0_i32 = arith.constant 0 : i32
    %c0_i32_0 = arith.constant 0 : i32
    return %arg0, %c0_i32 : i32, i32
  }
  func.func @transform_2(%arg0: i32) -> (i32, i32) {
    %c0_i32 = arith.constant 0 : i32
    %c0_i32_0 = arith.constant 0 : i32
    %c0_i32_1 = arith.constant 0 : i32
    return %c0_i32, %c0_i32_0 : i32, i32
  }
  func.func @transform_3(%arg0: i32) -> (i32, i32) {
    %c0_i32 = arith.constant 0 : i32
    %c0_i32_0 = arith.constant 0 : i32
    %c0_i32_1 = arith.constant 0 : i32
    return %c0_i32, %c0_i32_0 : i32, i32
  }
  func.func @transform_4(%arg0: i32) -> (i32, i32) {
    %c0_i32 = arith.constant 0 : i32
    %c0_i32_0 = arith.constant 0 : i32
    %c0_i32_1 = arith.constant 0 : i32
    return %c0_i32, %c0_i32_0 : i32, i32
  }
  func.func @transform_5(%arg0: i32) -> (i32, i32) {
    %c0_i32 = arith.constant 0 : i32
    %c0_i32_0 = arith.constant 0 : i32
    %c0_i32_1 = arith.constant 0 : i32
    return %c0_i32, %c0_i32_0 : i32, i32
  }
  func.func @transform_6(%arg0: i32) -> (i32, i32) {
    %c0_i32 = arith.constant 0 : i32
    %c0_i32_0 = arith.constant 0 : i32
    %c0_i32_1 = arith.constant 0 : i32
    return %c0_i32, %c0_i32_0 : i32, i32
  }
  func.func @transform_7(%arg0: i32) -> (i32, i32) {
    %c0_i32 = arith.constant 0 : i32
    %c0_i32_0 = arith.constant 0 : i32
    %c0_i32_1 = arith.constant 0 : i32
    return %c0_i32, %c0_i32_0 : i32, i32
  }
  func.func @transform_8(%arg0: i32) -> (i32, i32) {
    %c0_i32 = arith.constant 0 : i32
    %c0_i32_0 = arith.constant 0 : i32
    %c0_i32_1 = arith.constant 0 : i32
    return %c0_i32, %c0_i32_0 : i32, i32
  }
  func.func @transform_9(%arg0: i32) -> (i32, i32) {
    %c0_i32 = arith.constant 0 : i32
    %c0_i32_0 = arith.constant 0 : i32
    %c0_i32_1 = arith.constant 0 : i32
    return %c0_i32, %c0_i32_0 : i32, i32
  }
  func.func @transform_10(%arg0: i32) -> (i32, i32) {
    %c0_i32 = arith.constant 0 : i32
    %c0_i32_0 = arith.constant 0 : i32
    %c0_i32_1 = arith.constant 0 : i32
    return %c0_i32, %c0_i32_0 : i32, i32
  }
  func.func @transform_11(%arg0: i32) -> (i32, i32) {
    %c0_i32 = arith.constant 0 : i32
    %c0_i32_0 = arith.constant 0 : i32
    %c0_i32_1 = arith.constant 0 : i32
    return %c0_i32, %c0_i32_0 : i32, i32
  }
  func.func @transform_12(%arg0: i32) -> (i32, i32) {
    %c0_i32 = arith.constant 0 : i32
    %c0_i32_0 = arith.constant 0 : i32
    %c0_i32_1 = arith.constant 0 : i32
    return %c0_i32, %c0_i32_0 : i32, i32
  }
  func.func @transform_13(%arg0: i32) -> (i32, i32) {
    %c0_i32 = arith.constant 0 : i32
    %c0_i32_0 = arith.constant 0 : i32
    %c0_i32_1 = arith.constant 0 : i32
    return %c0_i32, %c0_i32_0 : i32, i32
  }
  func.func @transform_14(%arg0: i32) -> (i32, i32) {
    %c0_i32 = arith.constant 0 : i32
    %c0_i32_0 = arith.constant 0 : i32
    %c0_i32_1 = arith.constant 0 : i32
    return %c0_i32, %c0_i32_0 : i32, i32
  }
  func.func @transform_15(%arg0: i32) -> (i32, i32) {
    %c0_i32 = arith.constant 0 : i32
    %c0_i32_0 = arith.constant 0 : i32
    %c0_i32_1 = arith.constant 0 : i32
    return %c0_i32, %c0_i32_0 : i32, i32
  }
  func.func @transform_16(%arg0: i32) -> (i32, i32) {
    %c0_i32 = arith.constant 0 : i32
    %c0_i32_0 = arith.constant 0 : i32
    %c0_i32_1 = arith.constant 0 : i32
    return %c0_i32, %c0_i32_0 : i32, i32
  }
  func.func @transform_17(%arg0: i32) -> (i32, i32) {
    %c0_i32 = arith.constant 0 : i32
    %c0_i32_0 = arith.constant 0 : i32
    %c0_i32_1 = arith.constant 0 : i32
    return %c0_i32, %c0_i32_0 : i32, i32
  }
  func.func @transform_18(%arg0: i32) -> (i32, i32) {
    %c0_i32 = arith.constant 0 : i32
    %c0_i32_0 = arith.constant 0 : i32
    %c0_i32_1 = arith.constant 0 : i32
    return %c0_i32, %c0_i32_0 : i32, i32
  }
  func.func @transform_19(%arg0: i32) -> (i32, i32) {
    %c0_i32 = arith.constant 0 : i32
    %c0_i32_0 = arith.constant 0 : i32
    %c0_i32_1 = arith.constant 0 : i32
    return %c0_i32, %c0_i32_0 : i32, i32
  }
  func.func @transform_20(%arg0: i32) -> (i32, i32) {
    %c0_i32 = arith.constant 0 : i32
    %c0_i32_0 = arith.constant 0 : i32
    %c0_i32_1 = arith.constant 0 : i32
    return %c0_i32, %c0_i32_0 : i32, i32
  }
  func.func @transform_21(%arg0: i32) -> (i32, i32) {
    %c0_i32 = arith.constant 0 : i32
    %c0_i32_0 = arith.constant 0 : i32
    return %arg0, %c0_i32 : i32, i32
  }
}

</mosaic_0001>

<llo_original>
// kernel: fcq_forward.1
$region0: #{fcq_forward.1}
  #allocation0 [shape = 'u32[]', space=smem, size = 0x4, offset = 0x4, fixed_abs, tag = 'smem constant byte address 0x4 - core index']
  #allocation1 [shape = 'u32[144,128]{1,0:T(1,128)}', space=vmem, size = 0x12000, scoped, tag = 'internal scratch']
  #allocation2 [shape = 'f32[1,1]{1,0:T(1,128)S(1)}', space=vmem, size = 0x200, scoped, tag = 'scoped memory for fcq_forward.1']
  %s0 = inlined_call_operand.vmem [shape: f32[8,16], index: 0, kind: input, shape index: {}]
  %s1 = inlined_call_operand.vmem [shape: f32[8,4], index: 1, kind: input, shape index: {}]
  %s2 = inlined_call_operand.vmem [shape: f32[16,32], index: 2, kind: input, shape index: {}]
  %s3 = inlined_call_operand.vmem [shape: f32[1,32], index: 3, kind: input, shape index: {}]
  %s4 = inlined_call_operand.vmem [shape: f32[1,32], index: 4, kind: input, shape index: {}]
  %s5 = inlined_call_operand.vmem [shape: f32[1,32], index: 5, kind: input, shape index: {}]
  %s6 = inlined_call_operand.vmem [shape: f32[32,32], index: 6, kind: input, shape index: {}]
  %s7 = inlined_call_operand.vmem [shape: f32[1,32], index: 7, kind: input, shape index: {}]
  %s8 = inlined_call_operand.vmem [shape: f32[1,32], index: 8, kind: input, shape index: {}]
  %s9 = inlined_call_operand.vmem [shape: f32[1,32], index: 9, kind: input, shape index: {}]
  %s10 = inlined_call_operand.vmem [shape: f32[32,64], index: 10, kind: input, shape index: {}]
  %s11 = inlined_call_operand.vmem [shape: f32[4,64], index: 11, kind: input, shape index: {}]
  %s12 = inlined_call_operand.vmem [shape: f32[1,64], index: 12, kind: input, shape index: {}]
  %s13 = inlined_call_operand.vmem [shape: f32[1,64], index: 13, kind: input, shape index: {}]
  %s14 = inlined_call_operand.vmem [shape: f32[1,64], index: 14, kind: input, shape index: {}]
  %s15 = inlined_call_operand.vmem [shape: f32[64,32], index: 15, kind: input, shape index: {}]
  %s16 = inlined_call_operand.vmem [shape: f32[1,32], index: 16, kind: input, shape index: {}]
  %s17 = inlined_call_operand.vmem [shape: f32[1,32], index: 17, kind: input, shape index: {}]
  %s18 = inlined_call_operand.vmem [shape: f32[1,32], index: 18, kind: input, shape index: {}]
  %s19 = inlined_call_operand.vmem [shape: f32[1,32], index: 19, kind: input, shape index: {}]
  %s20 = inlined_call_operand.<no memory space> [shape: f32[1,1], index: 20, kind: input, shape index: {}]
  %s21 = inlined_call_operand.vmem [shape: f32[8,1], index: 21, kind: output, shape index: {}]
  %s22 = sld [smem:[#allocation0]]
  $region94: #{fcq_forward.1} parent=0
    _
  %s24 = ssub.s32 1, %s22
  %s25 = scalar_select 0, %s24, %s22
  %v26 = vstv %s20
  %27 = vst [vmem:[#allocation2] sm:$0x1] %v26
  // Predicated region
  $region2: #{fcq_forward.1} parent=0 // pred_check
    _
  $region3: #{fcq_forward.1} parent=0 // pred_check_branch
    %29 = sbr.rel (0) target = $region5
  $region4: #{fcq_forward.1} parent=0 // pred_region
    _
  $region5: #{fcq_forward.1} parent=0 // pred_fallthru
    _
  // Predicated region
  $region6: #{fcq_forward.1} parent=0 // pred_check
    _
  $region7: #{fcq_forward.1} parent=0 // pred_check_branch
    %31 = sbr.rel (0) target = $region9
  $region8: #{fcq_forward.1} parent=0 // pred_region
    _
  $region9: #{fcq_forward.1} parent=0 // pred_fallthru
    _
  // Predicated region
  $region10: #{fcq_forward.1} parent=0 // pred_check
    _
  $region11: #{fcq_forward.1} parent=0 // pred_check_branch
    %33 = sbr.rel (0) target = $region13
  $region12: #{fcq_forward.1} parent=0 // pred_region
    _
  $region13: #{fcq_forward.1} parent=0 // pred_fallthru
    _
  // Predicated region
  $region14: #{fcq_forward.1} parent=0 // pred_check
    _
  $region15: #{fcq_forward.1} parent=0 // pred_check_branch
    %35 = sbr.rel (0) target = $region17
  $region16: #{fcq_forward.1} parent=0 // pred_region
    _
  $region17: #{fcq_forward.1} parent=0 // pred_fallthru
    _
  // Predicated region
  $region18: #{fcq_forward.1} parent=0 // pred_check
    _
  $region19: #{fcq_forward.1} parent=0 // pred_check_branch
    %37 = sbr.rel (0) target = $region21
  $region20: #{fcq_forward.1} parent=0 // pred_region
    _
  $region21: #{fcq_forward.1} parent=0 // pred_fallthru
    _
  // Predicated region
  $region22: #{fcq_forward.1} parent=0 // pred_check
    _
  $region23: #{fcq_forward.1} parent=0 // pred_check_branch
    %39 = sbr.rel (0) target = $region25
  $region24: #{fcq_forward.1} parent=0 // pred_region
    _
  $region25: #{fcq_forward.1} parent=0 // pred_fallthru
    _
  // Predicated region
  $region26: #{fcq_forward.1} parent=0 // pred_check
    _
  $region27: #{fcq_forward.1} parent=0 // pred_check_branch
    %41 = sbr.rel (0) target = $region29
  $region28: #{fcq_forward.1} parent=0 // pred_region
    _
  $region29: #{fcq_forward.1} parent=0 // pred_fallthru
    _
  // Predicated region
  $region30: #{fcq_forward.1} parent=0 // pred_check
    _
  $region31: #{fcq_forward.1} parent=0 // pred_check_branch
    %43 = sbr.rel (0) target = $region33
  $region32: #{fcq_forward.1} parent=0 // pred_region
    _
  $region33: #{fcq_forward.1} parent=0 // pred_fallthru
    _
  // Predicated region
  $region34: #{fcq_forward.1} parent=0 // pred_check
    _
  $region35: #{fcq_forward.1} parent=0 // pred_check_branch
    %45 = sbr.rel (0) target = $region37
  $region36: #{fcq_forward.1} parent=0 // pred_region
    _
  $region37: #{fcq_forward.1} parent=0 // pred_fallthru
    _
  // Predicated region
  $region38: #{fcq_forward.1} parent=0 // pred_check
    _
  $region39: #{fcq_forward.1} parent=0 // pred_check_branch
    %47 = sbr.rel (0) target = $region41
  $region40: #{fcq_forward.1} parent=0 // pred_region
    _
  $region41: #{fcq_forward.1} parent=0 // pred_fallthru
    _
  // Predicated region
  $region42: #{fcq_forward.1} parent=0 // pred_check
    _
  $region43: #{fcq_forward.1} parent=0 // pred_check_branch
    %49 = sbr.rel (0) target = $region45
  $region44: #{fcq_forward.1} parent=0 // pred_region
    _
  $region45: #{fcq_forward.1} parent=0 // pred_fallthru
    _
  // Predicated region
  $region46: #{fcq_forward.1} parent=0 // pred_check
    _
  $region47: #{fcq_forward.1} parent=0 // pred_check_branch
    %51 = sbr.rel (0) target = $region49
  $region48: #{fcq_forward.1} parent=0 // pred_region
    _
  $region49: #{fcq_forward.1} parent=0 // pred_fallthru
    _
  // Predicated region
  $region50: #{fcq_forward.1} parent=0 // pred_check
    _
  $region51: #{fcq_forward.1} parent=0 // pred_check_branch
    %53 = sbr.rel (0) target = $region53
  $region52: #{fcq_forward.1} parent=0 // pred_region
    _
  $region53: #{fcq_forward.1} parent=0 // pred_fallthru
    _
  // Predicated region
  $region54: #{fcq_forward.1} parent=0 // pred_check
    _
  $region55: #{fcq_forward.1} parent=0 // pred_check_branch
    %55 = sbr.rel (0) target = $region57
  $region56: #{fcq_forward.1} parent=0 // pred_region
    _
  $region57: #{fcq_forward.1} parent=0 // pred_fallthru
    _
  // Predicated region
  $region58: #{fcq_forward.1} parent=0 // pred_check
    _
  $region59: #{fcq_forward.1} parent=0 // pred_check_branch
    %57 = sbr.rel (0) target = $region61
  $region60: #{fcq_forward.1} parent=0 // pred_region
    _
  $region61: #{fcq_forward.1} parent=0 // pred_fallthru
    _
  // Predicated region
  $region62: #{fcq_forward.1} parent=0 // pred_check
    _
  $region63: #{fcq_forward.1} parent=0 // pred_check_branch
    %59 = sbr.rel (0) target = $region65
  $region64: #{fcq_forward.1} parent=0 // pred_region
    _
  $region65: #{fcq_forward.1} parent=0 // pred_fallthru
    _
  // Predicated region
  $region66: #{fcq_forward.1} parent=0 // pred_check
    _
  $region67: #{fcq_forward.1} parent=0 // pred_check_branch
    %61 = sbr.rel (0) target = $region69
  $region68: #{fcq_forward.1} parent=0 // pred_region
    _
  $region69: #{fcq_forward.1} parent=0 // pred_fallthru
    _
  // Predicated region
  $region70: #{fcq_forward.1} parent=0 // pred_check
    _
  $region71: #{fcq_forward.1} parent=0 // pred_check_branch
    %63 = sbr.rel (0) target = $region73
  $region72: #{fcq_forward.1} parent=0 // pred_region
    _
  $region73: #{fcq_forward.1} parent=0 // pred_fallthru
    _
  // Predicated region
  $region74: #{fcq_forward.1} parent=0 // pred_check
    _
  $region75: #{fcq_forward.1} parent=0 // pred_check_branch
    %65 = sbr.rel (0) target = $region77
  $region76: #{fcq_forward.1} parent=0 // pred_region
    _
  $region77: #{fcq_forward.1} parent=0 // pred_fallthru
    _
  // Predicated region
  $region78: #{fcq_forward.1} parent=0 // pred_check
    _
  $region79: #{fcq_forward.1} parent=0 // pred_check_branch
    %67 = sbr.rel (0) target = $region81
  $region80: #{fcq_forward.1} parent=0 // pred_region
    _
  $region81: #{fcq_forward.1} parent=0 // pred_fallthru
    _
  // Predicated region
  $region82: #{fcq_forward.1} parent=0 // pred_check
    _
  $region83: #{fcq_forward.1} parent=0 // pred_check_branch
    %69 = sbr.rel (0) target = $region85
  $region84: #{fcq_forward.1} parent=0 // pred_region
    _
  $region85: #{fcq_forward.1} parent=0 // pred_fallthru
    _
  %v70 = vld [vmem:[%s0] sm:$0xff]
  %v71 = vld [vmem:[%s2] sm:$0xff]
  %v72 = vld [vmem:[%s2 + $0x8] sm:$0xff]
  %v73 = vld [vmem:[%s3] sm:$0x1]
  %v75 = vlaneseq
  %v76 = vshrl.u32 %v75, 7
  %v77 = vsub.s32 0, %v76
  %v78 = vrot.slane %v73, %v77
  %vm80 = vcmask 130048
  %v82 = vsel %vm80, %v70, 0
  %84 = vmatprep.subr.mxu0 0.0
  %85 = vmatpush1.msra.mxu0 %v71
  %86 = vmatprep.subr.mxu0 0.0
  %87 = vmatpush1.msra.mxu0 %v72
  %88 = vmatprep.subr.mxu0 0.0
  %89 = vmatpush1.msra.mxu0 0.0
  %90 = vmatprep.subr.mxu0 0.0
  %91 = vmatpush1.msra.mxu0 0.0
  %92 = vmatprep.subr.mxu0 0.0
  %93 = vmatpush1.msra.mxu0 0.0
  %94 = vmatprep.subr.mxu0 0.0
  %95 = vmatpush1.msra.mxu0 0.0
  %96 = vmatprep.subr.mxu0 0.0
  %97 = vmatpush1.msra.mxu0 0.0
  %98 = vmatprep.subr.mxu0 0.0
  %99 = vmatpush1.msra.mxu0 0.0
  %100 = vmatprep.subr.mxu0 0.0
  %101 = vmatpush1.msra.mxu0 0.0
  %102 = vmatprep.subr.mxu0 0.0
  %103 = vmatpush1.msra.mxu0 0.0
  %104 = vmatprep.subr.mxu0 0.0
  %105 = vmatpush1.msra.mxu0 0.0
  %106 = vmatprep.subr.mxu0 0.0
  %107 = vmatpush1.msra.mxu0 0.0
  %108 = vmatprep.subr.mxu0 0.0
  %109 = vmatpush1.msra.mxu0 0.0
  %110 = vmatprep.subr.mxu0 0.0
  %111 = vmatpush1.msra.mxu0 0.0
  %112 = vmatprep.subr.mxu0 0.0
  %113 = vmatpush1.msra.mxu0 0.0
  %114 = vmatprep.subr.mxu0 0.0
  %115 = vmatpush1.msra.mxu0 0.0
  %116 = vmatprep.subr.mxu0 0.0
  %117 = vmatpush1.msra.mxu0 0.0
  %118 = vmatprep.subr.mxu0 0.0
  %119 = vmatpush1.msra.mxu0 0.0
  %120 = vmatprep.subr.mxu0 0.0
  %121 = vmatpush1.msra.mxu0 0.0
  %122 = vmatprep.subr.mxu0 0.0
  %123 = vmatpush1.msra.mxu0 0.0
  %124 = vmatprep.subr.mxu0 0.0
  %125 = vmatpush1.msra.mxu0 0.0
  %126 = vmatprep.subr.mxu0 0.0
  %127 = vmatpush1.msra.mxu0 0.0
  %128 = vmatprep.subr.mxu0 0.0
  %129 = vmatpush1.msra.mxu0 0.0
  %130 = vmatprep.subr.mxu0 0.0
  %131 = vmatpush1.msra.mxu0 0.0
  %132 = vmatprep.subr.mxu0 0.0
  %133 = vmatpush1.msra.mxu0 0.0
  %134 = vmatprep.subr.mxu0 0.0
  %135 = vmatpush1.msra.mxu0 0.0
  %136 = vmatprep.subr.mxu0 0.0
  %137 = vmatpush1.msra.mxu0 0.0
  %138 = vmatprep.subr.mxu0 0.0
  %139 = vmatpush1.msra.mxu0 0.0
  %140 = vmatprep.subr.mxu0 0.0
  %141 = vmatpush1.msra.mxu0 0.0
  %142 = vmatprep.subr.mxu0 0.0
  %143 = vmatpush1.msra.mxu0 0.0
  %144 = vmatprep.subr.mxu0 0.0
  %145 = vmatpush1.msra.mxu0 0.0
  %146 = vmatprep.subr.mxu0 0.0
  %147 = vmatpush1.msra.mxu0 0.0
  %148 = vmatprep.mubr.f32.mxu0 0.0
  %149 = vmatmul.mubr.f32.gmra.mrb[0].mxu0 %v82
  %v150 = vpop.f32.mrb[0].mxu0
  %v151 = vadd.f32 %v78, %v150
  %v152 = vpop.f32.mrb[0].mxu0
  %153 = vdwg.mxu0
  %v154 = vld [vmem:[%s4] sm:$0x1]
  %v155 = vld [vmem:[%s5] sm:$0x1]
  %vm156 = vcmask 261120
  %v157 = vsel %vm156, %v151, 0.0
  %158 = vadd.xlane.f32.xlu0 %v157
  %v159 = vpop.xlane.xlu0 %158
  %v160 = vrcp.pop 32.0
  %v161 = vmul.f32 %v159, %v160
  %v162 = vsub.f32 %v151, %v161
  %v163 = vmul.f32 %v162, %v162
  %v164 = vsel %vm156, %v163, 0.0
  %165 = vadd.xlane.f32.xlu0 %v164
  %v166 = vpop.xlane.xlu0 %165
  %v167 = vmul.f32 %v166, %v160
  %v168 = vadd.f32 %v167, 1e-05
  %v169 = vrsqrt.pop %v168
  %v170 = vmul.f32 %v162, %v169
  %v172 = vlaneseq
  %v173 = vshrl.u32 %v172, 7
  %v174 = vsub.s32 0, %v173
  %v175 = vrot.slane %v154, %v174
  %v177 = vmul.f32 %v170, %v175
  %v179 = vlaneseq
  %v180 = vshrl.u32 %v179, 7
  %v181 = vsub.s32 0, %v180
  %v182 = vrot.slane %v155, %v181
  %v184 = vadd.f32 %v177, %v182
  %v185 = vmax.f32 %v184, 0.0
  %v186 = vld [vmem:[%s6] sm:$0xff]
  %v187 = vld [vmem:[%s6 + $0x8] sm:$0xff]
  %v188 = vld [vmem:[%s6 + $0x10] sm:$0xff]
  %v189 = vld [vmem:[%s6 + $0x18] sm:$0xff]
  %v190 = vld [vmem:[%s7] sm:$0x1]
  %v192 = vlaneseq
  %v193 = vshrl.u32 %v192, 7
  %v194 = vsub.s32 0, %v193
  %v195 = vrot.slane %v190, %v194
  %v198 = vsel %vm156, %v185, 0
  %200 = vmatprep.subr.mxu0 0.0
  %201 = vmatpush1.msra.mxu0 %v186
  %202 = vmatprep.subr.mxu0 0.0
  %203 = vmatpush1.msra.mxu0 %v187
  %204 = vmatprep.subr.mxu0 0.0
  %205 = vmatpush1.msra.mxu0 %v188
  %206 = vmatprep.subr.mxu0 0.0
  %207 = vmatpush1.msra.mxu0 %v189
  %208 = vmatprep.subr.mxu0 0.0
  %209 = vmatpush1.msra.mxu0 0.0
  %210 = vmatprep.subr.mxu0 0.0
  %211 = vmatpush1.msra.mxu0 0.0
  %212 = vmatprep.subr.mxu0 0.0
  %213 = vmatpush1.msra.mxu0 0.0
  %214 = vmatprep.subr.mxu0 0.0
  %215 = vmatpush1.msra.mxu0 0.0
  %216 = vmatprep.subr.mxu0 0.0
  %217 = vmatpush1.msra.mxu0 0.0
  %218 = vmatprep.subr.mxu0 0.0
  %219 = vmatpush1.msra.mxu0 0.0
  %220 = vmatprep.subr.mxu0 0.0
  %221 = vmatpush1.msra.mxu0 0.0
  %222 = vmatprep.subr.mxu0 0.0
  %223 = vmatpush1.msra.mxu0 0.0
  %224 = vmatprep.subr.mxu0 0.0
  %225 = vmatpush1.msra.mxu0 0.0
  %226 = vmatprep.subr.mxu0 0.0
  %227 = vmatpush1.msra.mxu0 0.0
  %228 = vmatprep.subr.mxu0 0.0
  %229 = vmatpush1.msra.mxu0 0.0
  %230 = vmatprep.subr.mxu0 0.0
  %231 = vmatpush1.msra.mxu0 0.0
  %232 = vmatprep.subr.mxu0 0.0
  %233 = vmatpush1.msra.mxu0 0.0
  %234 = vmatprep.subr.mxu0 0.0
  %235 = vmatpush1.msra.mxu0 0.0
  %236 = vmatprep.subr.mxu0 0.0
  %237 = vmatpush1.msra.mxu0 0.0
  %238 = vmatprep.subr.mxu0 0.0
  %239 = vmatpush1.msra.mxu0 0.0
  %240 = vmatprep.subr.mxu0 0.0
  %241 = vmatpush1.msra.mxu0 0.0
  %242 = vmatprep.subr.mxu0 0.0
  %243 = vmatpush1.msra.mxu0 0.0
  %244 = vmatprep.subr.mxu0 0.0
  %245 = vmatpush1.msra.mxu0 0.0
  %246 = vmatprep.subr.mxu0 0.0
  %247 = vmatpush1.msra.mxu0 0.0
  %248 = vmatprep.subr.mxu0 0.0
  %249 = vmatpush1.msra.mxu0 0.0
  %250 = vmatprep.subr.mxu0 0.0
  %251 = vmatpush1.msra.mxu0 0.0
  %252 = vmatprep.subr.mxu0 0.0
  %253 = vmatpush1.msra.mxu0 0.0
  %254 = vmatprep.subr.mxu0 0.0
  %255 = vmatpush1.msra.mxu0 0.0
  %256 = vmatprep.subr.mxu0 0.0
  %257 = vmatpush1.msra.mxu0 0.0
  %258 = vmatprep.subr.mxu0 0.0
  %259 = vmatpush1.msra.mxu0 0.0
  %260 = vmatprep.subr.mxu0 0.0
  %261 = vmatpush1.msra.mxu0 0.0
  %262 = vmatprep.subr.mxu0 0.0
  %263 = vmatpush1.msra.mxu0 0.0
  %264 = vmatprep.mubr.f32.mxu0 0.0
  %265 = vmatmul.mubr.f32.gmra.mrb[0].mxu0 %v198
  %v266 = vpop.f32.mrb[0].mxu0
  %v267 = vadd.f32 %v195, %v266
  %v268 = vpop.f32.mrb[0].mxu0
  %269 = vdwg.mxu0
  %v270 = vld [vmem:[%s8] sm:$0x1]
  %v271 = vld [vmem:[%s9] sm:$0x1]
  %v272 = vsel %vm156, %v267, 0.0
  %273 = vadd.xlane.f32.xlu0 %v272
  %v274 = vpop.xlane.xlu0 %273
  %v275 = vmul.f32 %v274, %v160
  %v276 = vsub.f32 %v267, %v275
  %v277 = vmul.f32 %v276, %v276
  %v278 = vsel %vm156, %v277, 0.0
  %279 = vadd.xlane.f32.xlu0 %v278
  %v280 = vpop.xlane.xlu0 %279
  %v281 = vmul.f32 %v280, %v160
  %v282 = vadd.f32 %v281, 1e-05
  %v283 = vrsqrt.pop %v282
  %v284 = vmul.f32 %v276, %v283
  %v286 = vlaneseq
  %v287 = vshrl.u32 %v286, 7
  %v288 = vsub.s32 0, %v287
  %v289 = vrot.slane %v270, %v288
  %v291 = vmul.f32 %v284, %v289
  %v293 = vlaneseq
  %v294 = vshrl.u32 %v293, 7
  %v295 = vsub.s32 0, %v294
  %v296 = vrot.slane %v271, %v295
  %v298 = vadd.f32 %v291, %v296
  %v299 = vmax.f32 %v298, 0.0
  %v300 = vld [vmem:[%s1] sm:$0xff]
  %v301 = vld [vmem:[%s10] sm:$0xff]
  %v302 = vld [vmem:[%s10 + $0x8] sm:$0xff]
  %v303 = vld [vmem:[%s10 + $0x10] sm:$0xff]
  %v304 = vld [vmem:[%s10 + $0x18] sm:$0xff]
  %v305 = vld [vmem:[%s11] sm:$0xf]
  %vm306 = vcmask 31744
  %v308 = vsel %vm306, %v300, 0
  %vm310 = vcmask 1043456
  %v312 = vsel %vm310, %v305, 0
  %314 = vmatprep.subr.mxu0 0.0
  %315 = vmatpush1.msra.mxu0 %v312
  %316 = vmatprep.subr.mxu0 0.0
  %317 = vmatpush1.msra.mxu0 0.0
  %318 = vmatprep.subr.mxu0 0.0
  %319 = vmatpush1.msra.mxu0 0.0
  %320 = vmatprep.subr.mxu0 0.0
  %321 = vmatpush1.msra.mxu0 0.0
  %322 = vmatprep.subr.mxu0 0.0
  %323 = vmatpush1.msra.mxu0 0.0
  %324 = vmatprep.subr.mxu0 0.0
  %325 = vmatpush1.msra.mxu0 0.0
  %326 = vmatprep.subr.mxu0 0.0
  %327 = vmatpush1.msra.mxu0 0.0
  %328 = vmatprep.subr.mxu0 0.0
  %329 = vmatpush1.msra.mxu0 0.0
  %330 = vmatprep.subr.mxu0 0.0
  %331 = vmatpush1.msra.mxu0 0.0
  %332 = vmatprep.subr.mxu0 0.0
  %333 = vmatpush1.msra.mxu0 0.0
  %334 = vmatprep.subr.mxu0 0.0
  %335 = vmatpush1.msra.mxu0 0.0
  %336 = vmatprep.subr.mxu0 0.0
  %337 = vmatpush1.msra.mxu0 0.0
  %338 = vmatprep.subr.mxu0 0.0
  %339 = vmatpush1.msra.mxu0 0.0
  %340 = vmatprep.subr.mxu0 0.0
  %341 = vmatpush1.msra.mxu0 0.0
  %342 = vmatprep.subr.mxu0 0.0
  %343 = vmatpush1.msra.mxu0 0.0
  %344 = vmatprep.subr.mxu0 0.0
  %345 = vmatpush1.msra.mxu0 0.0
  %346 = vmatprep.subr.mxu0 0.0
  %347 = vmatpush1.msra.mxu0 0.0
  %348 = vmatprep.subr.mxu0 0.0
  %349 = vmatpush1.msra.mxu0 0.0
  %350 = vmatprep.subr.mxu0 0.0
  %351 = vmatpush1.msra.mxu0 0.0
  %352 = vmatprep.subr.mxu0 0.0
  %353 = vmatpush1.msra.mxu0 0.0
  %354 = vmatprep.subr.mxu0 0.0
  %355 = vmatpush1.msra.mxu0 0.0
  %356 = vmatprep.subr.mxu0 0.0
  %357 = vmatpush1.msra.mxu0 0.0
  %358 = vmatprep.subr.mxu0 0.0
  %359 = vmatpush1.msra.mxu0 0.0
  %360 = vmatprep.subr.mxu0 0.0
  %361 = vmatpush1.msra.mxu0 0.0
  %362 = vmatprep.subr.mxu0 0.0
  %363 = vmatpush1.msra.mxu0 0.0
  %364 = vmatprep.subr.mxu0 0.0
  %365 = vmatpush1.msra.mxu0 0.0
  %366 = vmatprep.subr.mxu0 0.0
  %367 = vmatpush1.msra.mxu0 0.0
  %368 = vmatprep.subr.mxu0 0.0
  %369 = vmatpush1.msra.mxu0 0.0
  %370 = vmatprep.subr.mxu0 0.0
  %371 = vmatpush1.msra.mxu0 0.0
  %372 = vmatprep.subr.mxu0 0.0
  %373 = vmatpush1.msra.mxu0 0.0
  %374 = vmatprep.subr.mxu0 0.0
  %375 = vmatpush1.msra.mxu0 0.0
  %376 = vmatprep.subr.mxu0 0.0
  %377 = vmatpush1.msra.mxu0 0.0
  %378 = vmatprep.mubr.f32.mxu0 0.0
  %379 = vmatmul.mubr.f32.gmra.mrb[0].mxu0 %v308
  %v380 = vpop.f32.mrb[0].mxu0
  %v381 = vadd.f32 0.0, %v380
  %v382 = vpop.f32.mrb[0].mxu0
  %383 = vdwg.mxu0
  %v385 = vsel %vm156, %v299, 0
  %387 = vmatprep.subr.mxu0 0.0
  %388 = vmatpush1.msra.mxu0 %v301
  %389 = vmatprep.subr.mxu0 0.0
  %390 = vmatpush1.msra.mxu0 %v302
  %391 = vmatprep.subr.mxu0 0.0
  %392 = vmatpush1.msra.mxu0 %v303
  %393 = vmatprep.subr.mxu0 0.0
  %394 = vmatpush1.msra.mxu0 %v304
  %395 = vmatprep.subr.mxu0 0.0
  %396 = vmatpush1.msra.mxu0 0.0
  %397 = vmatprep.subr.mxu0 0.0
  %398 = vmatpush1.msra.mxu0 0.0
  %399 = vmatprep.subr.mxu0 0.0
  %400 = vmatpush1.msra.mxu0 0.0
  %401 = vmatprep.subr.mxu0 0.0
  %402 = vmatpush1.msra.mxu0 0.0
  %403 = vmatprep.subr.mxu0 0.0
  %404 = vmatpush1.msra.mxu0 0.0
  %405 = vmatprep.subr.mxu0 0.0
  %406 = vmatpush1.msra.mxu0 0.0
  %407 = vmatprep.subr.mxu0 0.0
  %408 = vmatpush1.msra.mxu0 0.0
  %409 = vmatprep.subr.mxu0 0.0
  %410 = vmatpush1.msra.mxu0 0.0
  %411 = vmatprep.subr.mxu0 0.0
  %412 = vmatpush1.msra.mxu0 0.0
  %413 = vmatprep.subr.mxu0 0.0
  %414 = vmatpush1.msra.mxu0 0.0
  %415 = vmatprep.subr.mxu0 0.0
  %416 = vmatpush1.msra.mxu0 0.0
  %417 = vmatprep.subr.mxu0 0.0
  %418 = vmatpush1.msra.mxu0 0.0
  %419 = vmatprep.subr.mxu0 0.0
  %420 = vmatpush1.msra.mxu0 0.0
  %421 = vmatprep.subr.mxu0 0.0
  %422 = vmatpush1.msra.mxu0 0.0
  %423 = vmatprep.subr.mxu0 0.0
  %424 = vmatpush1.msra.mxu0 0.0
  %425 = vmatprep.subr.mxu0 0.0
  %426 = vmatpush1.msra.mxu0 0.0
  %427 = vmatprep.subr.mxu0 0.0
  %428 = vmatpush1.msra.mxu0 0.0
  %429 = vmatprep.subr.mxu0 0.0
  %430 = vmatpush1.msra.mxu0 0.0
  %431 = vmatprep.subr.mxu0 0.0
  %432 = vmatpush1.msra.mxu0 0.0
  %433 = vmatprep.subr.mxu0 0.0
  %434 = vmatpush1.msra.mxu0 0.0
  %435 = vmatprep.subr.mxu0 0.0
  %436 = vmatpush1.msra.mxu0 0.0
  %437 = vmatprep.subr.mxu0 0.0
  %438 = vmatpush1.msra.mxu0 0.0
  %439 = vmatprep.subr.mxu0 0.0
  %440 = vmatpush1.msra.mxu0 0.0
  %441 = vmatprep.subr.mxu0 0.0
  %442 = vmatpush1.msra.mxu0 0.0
  %443 = vmatprep.subr.mxu0 0.0
  %444 = vmatpush1.msra.mxu0 0.0
  %445 = vmatprep.subr.mxu0 0.0
  %446 = vmatpush1.msra.mxu0 0.0
  %447 = vmatprep.subr.mxu0 0.0
  %448 = vmatpush1.msra.mxu0 0.0
  %449 = vmatprep.subr.mxu0 0.0
  %450 = vmatpush1.msra.mxu0 0.0
  %451 = vmatprep.mubr.f32.mxu0 0.0
  %452 = vmatmul.mubr.f32.gmra.mrb[0].mxu0 %v385
  %v453 = vpop.f32.mrb[0].mxu0
  %v454 = vadd.f32 %v381, %v453
  %v455 = vpop.f32.mrb[0].mxu0
  %456 = vdwg.mxu0
  %v457 = vld [vmem:[%s12] sm:$0x1]
  %v459 = vlaneseq
  %v460 = vshrl.u32 %v459, 7
  %v461 = vsub.s32 0, %v460
  %v462 = vrot.slane %v457, %v461
  %v464 = vadd.f32 %v454, %v462
  %v465 = vld [vmem:[%s13] sm:$0x1]
  %v466 = vld [vmem:[%s14] sm:$0x1]
  %vm467 = vcmask 523264
  %v468 = vsel %vm467, %v464, 0.0
  %469 = vadd.xlane.f32.xlu0 %v468
  %v470 = vpop.xlane.xlu0 %469
  %v471 = vrcp.pop 64.0
  %v472 = vmul.f32 %v470, %v471
  %v473 = vsub.f32 %v464, %v472
  %v474 = vmul.f32 %v473, %v473
  %v475 = vsel %vm467, %v474, 0.0
  %476 = vadd.xlane.f32.xlu0 %v475
  %v477 = vpop.xlane.xlu0 %476
  %v478 = vmul.f32 %v477, %v471
  %v479 = vadd.f32 %v478, 1e-05
  %v480 = vrsqrt.pop %v479
  %v481 = vmul.f32 %v473, %v480
  %v483 = vlaneseq
  %v484 = vshrl.u32 %v483, 7
  %v485 = vsub.s32 0, %v484
  %v486 = vrot.slane %v465, %v485
  %v488 = vmul.f32 %v481, %v486
  %v490 = vlaneseq
  %v491 = vshrl.u32 %v490, 7
  %v492 = vsub.s32 0, %v491
  %v493 = vrot.slane %v466, %v492
  %v495 = vadd.f32 %v488, %v493
  %v496 = vmax.f32 %v495, 0.0
  %v497 = vld [vmem:[%s15] sm:$0xff]
  %v498 = vld [vmem:[%s15 + $0x8] sm:$0xff]
  %v499 = vld [vmem:[%s15 + $0x10] sm:$0xff]
  %v500 = vld [vmem:[%s15 + $0x18] sm:$0xff]
  %v501 = vld [vmem:[%s15 + $0x20] sm:$0xff]
  %v502 = vld [vmem:[%s15 + $0x28] sm:$0xff]
  %v503 = vld [vmem:[%s15 + $0x30] sm:$0xff]
  %v504 = vld [vmem:[%s15 + $0x38] sm:$0xff]
  %v505 = vld [vmem:[%s16] sm:$0x1]
  %v507 = vlaneseq
  %v508 = vshrl.u32 %v507, 7
  %v509 = vsub.s32 0, %v508
  %v510 = vrot.slane %v505, %v509
  %v513 = vsel %vm467, %v496, 0
  %515 = vmatprep.subr.mxu0 0.0
  %516 = vmatpush1.msra.mxu0 %v497
  %517 = vmatprep.subr.mxu0 0.0
  %518 = vmatpush1.msra.mxu0 %v498
  %519 = vmatprep.subr.mxu0 0.0
  %520 = vmatpush1.msra.mxu0 %v499
  %521 = vmatprep.subr.mxu0 0.0
  %522 = vmatpush1.msra.mxu0 %v500
  %523 = vmatprep.subr.mxu0 0.0
  %524 = vmatpush1.msra.mxu0 %v501
  %525 = vmatprep.subr.mxu0 0.0
  %526 = vmatpush1.msra.mxu0 %v502
  %527 = vmatprep.subr.mxu0 0.0
  %528 = vmatpush1.msra.mxu0 %v503
  %529 = vmatprep.subr.mxu0 0.0
  %530 = vmatpush1.msra.mxu0 %v504
  %531 = vmatprep.subr.mxu0 0.0
  %532 = vmatpush1.msra.mxu0 0.0
  %533 = vmatprep.subr.mxu0 0.0
  %534 = vmatpush1.msra.mxu0 0.0
  %535 = vmatprep.subr.mxu0 0.0
  %536 = vmatpush1.msra.mxu0 0.0
  %537 = vmatprep.subr.mxu0 0.0
  %538 = vmatpush1.msra.mxu0 0.0
  %539 = vmatprep.subr.mxu0 0.0
  %540 = vmatpush1.msra.mxu0 0.0
  %541 = vmatprep.subr.mxu0 0.0
  %542 = vmatpush1.msra.mxu0 0.0
  %543 = vmatprep.subr.mxu0 0.0
  %544 = vmatpush1.msra.mxu0 0.0
  %545 = vmatprep.subr.mxu0 0.0
  %546 = vmatpush1.msra.mxu0 0.0
  %547 = vmatprep.subr.mxu0 0.0
  %548 = vmatpush1.msra.mxu0 0.0
  %549 = vmatprep.subr.mxu0 0.0
  %550 = vmatpush1.msra.mxu0 0.0
  %551 = vmatprep.subr.mxu0 0.0
  %552 = vmatpush1.msra.mxu0 0.0
  %553 = vmatprep.subr.mxu0 0.0
  %554 = vmatpush1.msra.mxu0 0.0
  %555 = vmatprep.subr.mxu0 0.0
  %556 = vmatpush1.msra.mxu0 0.0
  %557 = vmatprep.subr.mxu0 0.0
  %558 = vmatpush1.msra.mxu0 0.0
  %559 = vmatprep.subr.mxu0 0.0
  %560 = vmatpush1.msra.mxu0 0.0
  %561 = vmatprep.subr.mxu0 0.0
  %562 = vmatpush1.msra.mxu0 0.0
  %563 = vmatprep.subr.mxu0 0.0
  %564 = vmatpush1.msra.mxu0 0.0
  %565 = vmatprep.subr.mxu0 0.0
  %566 = vmatpush1.msra.mxu0 0.0
  %567 = vmatprep.subr.mxu0 0.0
  %568 = vmatpush1.msra.mxu0 0.0
  %569 = vmatprep.subr.mxu0 0.0
  %570 = vmatpush1.msra.mxu0 0.0
  %571 = vmatprep.subr.mxu0 0.0
  %572 = vmatpush1.msra.mxu0 0.0
  %573 = vmatprep.subr.mxu0 0.0
  %574 = vmatpush1.msra.mxu0 0.0
  %575 = vmatprep.subr.mxu0 0.0
  %576 = vmatpush1.msra.mxu0 0.0
  %577 = vmatprep.subr.mxu0 0.0
  %578 = vmatpush1.msra.mxu0 0.0
  %579 = vmatprep.mubr.f32.mxu0 0.0
  %580 = vmatmul.mubr.f32.gmra.mrb[0].mxu0 %v513
  %v581 = vpop.f32.mrb[0].mxu0
  %v582 = vadd.f32 %v510, %v581
  %v583 = vpop.f32.mrb[0].mxu0
  %584 = vdwg.mxu0
  %v585 = vld [vmem:[%s17] sm:$0x1]
  %v586 = vld [vmem:[%s18] sm:$0x1]
  %v587 = vsel %vm156, %v582, 0.0
  %588 = vadd.xlane.f32.xlu0 %v587
  %v589 = vpop.xlane.xlu0 %588
  %v590 = vmul.f32 %v589, %v160
  %v591 = vsub.f32 %v582, %v590
  %v592 = vmul.f32 %v591, %v591
  %v593 = vsel %vm156, %v592, 0.0
  %594 = vadd.xlane.f32.xlu0 %v593
  %v595 = vpop.xlane.xlu0 %594
  %v596 = vmul.f32 %v595, %v160
  %v597 = vadd.f32 %v596, 1e-05
  %v598 = vrsqrt.pop %v597
  %v599 = vmul.f32 %v591, %v598
  %v601 = vlaneseq
  %v602 = vshrl.u32 %v601, 7
  %v603 = vsub.s32 0, %v602
  %v604 = vrot.slane %v585, %v603
  %v606 = vmul.f32 %v599, %v604
  %v608 = vlaneseq
  %v609 = vshrl.u32 %v608, 7
  %v610 = vsub.s32 0, %v609
  %v611 = vrot.slane %v586, %v610
  %v613 = vadd.f32 %v606, %v611
  %v614 = vmax.f32 %v613, 0.0
  %v615 = vld [vmem:[%s19] sm:$0x1]
  %v617 = vlaneseq
  %v618 = vshrl.u32 %v617, 7
  %v619 = vsub.s32 0, %v618
  %v620 = vrot.slane %v615, %v619
  %v622 = vmul.f32 %v614, %v620
  %v623 = vsel %vm156, %v622, 0.0
  %624 = vadd.xlane.f32.xlu0 %v623
  %v625 = vpop.xlane.xlu0 %624
  %v626 = vld [vmem:[#allocation2] sm:$0x1]
  %v628 = vlaneseq
  %v629 = vshrl.u32 %v628, 7
  %v630 = vsub.s32 0, %v629
  %v631 = vrot.slane %v626, %v630
  %v633 = vadd.f32 %v625, %v631
  %vm634 = vcmask 7168
  %635 = vst.msk [vmem:[%s21] sm:$0xff] %vm634, %v633
  // Predicated region
  $region86: #{fcq_forward.1} parent=0 // pred_check
    _
  $region87: #{fcq_forward.1} parent=0 // pred_check_branch
    %637 = sbr.rel (0) target = $region89
  $region88: #{fcq_forward.1} parent=0 // pred_region
    _
  $region89: #{fcq_forward.1} parent=0 // pred_fallthru
    _
  // Predicated region
  $region90: #{fcq_forward.1} parent=0 // pred_check
    _
  $region91: #{fcq_forward.1} parent=0 // pred_check_branch
    %639 = sbr.rel (0) target = $region93
  $region92: #{fcq_forward.1} parent=0 // pred_region
    _
  $region93: #{fcq_forward.1} parent=0 // pred_fallthru
    _

</llo_original>
